<compile_context>
chip_gen: v7x
topology: tpu7x:2x2x1
jax: 0.10.0
libtpu: 0.0.40
codegen_flags: <defaults>
</compile_context>

<pallas_src>
import jax
import jax.numpy as jnp
import numpy as np
from jax.experimental import pallas as pl
from jax.experimental.pallas import tpu as pltpu


def _h_swish_kernel(x_ref, o_ref):
    """Elementwise h_swish on one lane-dense tile.

    x_ref : (block_rows, lane_width) VMEM input tile
    o_ref : (block_rows, lane_width) VMEM output tile
    """
    x = x_ref[...]
    xf = x.astype(jnp.float32)  # no-op for f32 inputs; safe on v5e for bf16
    # h_sigmoid(x) = ReLU6(x + 3) / 6 ; h_swish(x) = x * h_sigmoid(x)
    hs = jnp.clip(xf + 3.0, 0.0, 6.0) * (1.0 / 6.0)
    o_ref[...] = (xf * hs).astype(o_ref.dtype)


def _round_up(a, b):
    return ((a + b - 1) // b) * b


def h_swish_forward(x, *, lane_width=512, max_block_rows=1024):
    """Apply h_swish elementwise to `x` (any shape, e.g. NCHW) via Pallas."""
    orig_shape = x.shape
    orig_dtype = x.dtype
    total = int(np.prod(orig_shape)) if orig_shape else 1
    if total == 0:
        return x

    # Sublane tile for the dtype: 8 for 4-byte, 16 for 2-byte, 32 for 1-byte.
    itemsize = jnp.dtype(orig_dtype).itemsize
    sublane = 8 * max(1, 4 // itemsize)

    # Pick the widest lane width (multiple of 128) that divides the element
    # count, so no padding copy is needed.  Only truly ragged sizes
    # (total % 128 != 0) take the padded fallback.
    lw = None
    for cand in (lane_width, 512, 384, 256, 128):
        if cand % 128 == 0 and total % cand == 0:
            lw = cand
            break
    padded = lw is None
    if padded:
        lw = 128

    flat = x.reshape(-1)
    rows = pl.cdiv(total, lw)
    if padded:
        # Rare path: h_swish(0) == 0, so zero-padding the tail is benign.
        flat = jnp.pad(flat, (0, rows * lw - total))
    x2d = flat.reshape(rows, lw)

    # Block rows: multiple of the sublane tile, large enough to amortize the
    # per-grid-step overhead (~2 MiB f32 tiles at 1024 x 512), capped so the
    # grid keeps >= 2 steps (megacore sharding on v7x) whenever rows allows.
    block_rows = min(
        _round_up(max_block_rows, sublane),
        max(sublane, _round_up(pl.cdiv(rows, 2), sublane)),
    )
    if block_rows >= rows:
        # Single full-extent block along rows (always layout-legal, even when
        # rows is not a sublane multiple).
        block_rows = rows

    grid = (pl.cdiv(rows, block_rows),)  # last block may be ragged; Pallas masks

    out2d = pl.pallas_call(
        _h_swish_kernel,
        out_shape=jax.ShapeDtypeStruct((rows, lw), orig_dtype),
        grid=grid,
        in_specs=[pl.BlockSpec((block_rows, lw), lambda i: (i, 0))],
        out_specs=pl.BlockSpec((block_rows, lw), lambda i: (i, 0)),
        compiler_params=pltpu.CompilerParams(
            dimension_semantics=("parallel",),
        ),
    )(x2d)

    if padded:
        return out2d.reshape(-1)[:total].reshape(orig_shape)
    return out2d.reshape(orig_shape)


def h_swish_reference(x):
    """Pure-JAX reference matching the PyTorch h_swish forward pass."""
    return x * (jnp.clip(x + 3.0, 0.0, 6.0) / 6.0)


if __name__ == "__main__":
    # Small NCHW input consistent with how h_swish is used inside CBAM blocks.
    B, C, H, W = 2, 4, 16, 16

    key = jax.random.PRNGKey(0)
    # Scale so both the x < -3 (clamp to 0) and x > 3 (clamp to 6) branches
    # of ReLU6 are exercised.
    x = jax.random.normal(key, (B, C, H, W), dtype=jnp.float32) * 4.0

    out = jax.block_until_ready(h_swish_forward(x))
    ref = jax.block_until_ready(h_swish_reference(x))
    np.testing.assert_allclose(np.asarray(out), np.asarray(ref),
                               rtol=1e-6, atol=1e-6)

    # Ragged-size input (not a multiple of 128 elements) exercises the
    # padded fallback + ragged last row-block path.
    x2 = jax.random.normal(jax.random.PRNGKey(1), (3, 5, 7, 11),
                           dtype=jnp.float32) * 4.0
    out2 = jax.block_until_ready(h_swish_forward(x2))
    ref2 = jax.block_until_ready(h_swish_reference(x2))
    np.testing.assert_allclose(np.asarray(out2), np.asarray(ref2),
                               rtol=1e-6, atol=1e-6)

    print("KERNEL_OK")
</pallas_src>

<mosaic_0001>
module attributes {stable_mosaic.version = 11 : i64} {
  func.func @_h_swish_kernel(%arg0: i32, %arg1: memref<4x512xf32, #tpu.memory_space<vmem>>, %arg2: memref<4x512xf32, #tpu.memory_space<vmem>>) attributes {dimension_semantics = [#tpu.dimension_semantics<parallel>], iteration_bounds = array<i64: 1>, scalar_prefetch = 0 : i64, scratch_operands = 0 : i64, tpu.core_type = #tpu.core_type<tc>, window_params = [{transform_indices = @transform_0, window_bounds = array<i64: 4, 512>}, {transform_indices = @transform_1, window_bounds = array<i64: 4, 512>}]} {
    %c0 = arith.constant 0 : index
    %c0_0 = arith.constant 0 : index
    %0 = vector.load %arg1[%c0, %c0_0] : memref<4x512xf32, #tpu.memory_space<vmem>>, vector<4x512xf32>
    %cst = arith.constant 3.000000e+00 : f32
    %1 = vector.broadcast %cst : f32 to vector<4x512xf32>
    %2 = arith.addf %0, %1 : vector<4x512xf32>
    %cst_1 = arith.constant 0.000000e+00 : f32
    %cst_2 = arith.constant 6.000000e+00 : f32
    %3 = vector.broadcast %cst_1 : f32 to vector<4x512xf32>
    %4 = arith.maximumf %3, %2 : vector<4x512xf32>
    %5 = vector.broadcast %cst_2 : f32 to vector<4x512xf32>
    %6 = arith.minimumf %5, %4 : vector<4x512xf32>
    %cst_3 = arith.constant 0.166666672 : f32
    %7 = vector.broadcast %cst_3 : f32 to vector<4x512xf32>
    %8 = arith.mulf %6, %7 : vector<4x512xf32>
    %9 = arith.mulf %0, %8 : vector<4x512xf32>
    %c0_4 = arith.constant 0 : index
    %c0_5 = arith.constant 0 : index
    %10 = vector.load %arg2[%c0_4, %c0_5] : memref<4x512xf32, #tpu.memory_space<vmem>>, vector<4x512xf32>
    tpu.vector_store %arg2[%c0_4, %c0_5], %9 {strides = array<i32>} : memref<4x512xf32, #tpu.memory_space<vmem>>, vector<4x512xf32>,
    return
  }
  func.func @transform_0(%arg0: i32) -> (i32, i32) {
    %c0_i32 = arith.constant 0 : i32
    %c0_i32_0 = arith.constant 0 : i32
    return %arg0, %c0_i32 : i32, i32
  }
  func.func @transform_1(%arg0: i32) -> (i32, i32) {
    %c0_i32 = arith.constant 0 : i32
    %c0_i32_0 = arith.constant 0 : i32
    return %arg0, %c0_i32 : i32, i32
  }
}

</mosaic_0001>

<llo_original>
// kernel: tpu_custom_call.1
$region0: #{tpu_custom_call.1}
  #allocation0 [shape = 'u32[]', space=smem, size = 0x4, offset = 0x4, fixed_abs, tag = 'smem constant byte address 0x4 - core index']
  #allocation1 [shape = 'u32[144,128]{1,0:T(1,128)}', space=vmem, size = 0x12000, scoped, tag = 'internal scratch']
  %s0 = inlined_call_operand.hbm [shape: f32[4,512], index: 0, kind: input, shape index: {}]
  %s1 = inlined_call_operand.hbm [shape: f32[4,512], index: 1, kind: output, shape index: {}]
  %s2 = sld [smem:[#allocation0]]
  $region18: #{tpu_custom_call.1} parent=0
    _
  %s4 = ssub.s32 1, %s2
  %s5 = scalar_select 0, %s4, %s2
  $region1: #{tpu_custom_call.1} parent=0
    #allocation2 [shape = 'u8[8192]{0}', space=vmem, size = 0x2000, scoped, tag = 'input window, operand 0, single buffered']
    #allocation3 [shape = 's32[1]{0}', space=sflag, size = 0x4, scoped, tag = 'scoped memory for tpu_custom_call.1']
    #allocation4 [shape = 's32[1]{0}', space=sflag, size = 0x4, scoped, tag = 'scoped memory for tpu_custom_call.1']
    #allocation5 [shape = 'u8[8192]{0}', space=vmem, size = 0x2000, scoped, tag = 'output window, operand 0, single buffered']
    %6 = vsyncpa [#allocation3], 0
    %7 = vsyncpa [#allocation4], 0
    // Predicated region
    $region2: #{tpu_custom_call.1} parent=1 // pred_check
      _
    $region3: #{tpu_custom_call.1} parent=1 // pred_check_branch
      %9 = sbr.rel (0) target = $region5
    $region4: #{tpu_custom_call.1} parent=1 // pred_region
      %s11 = ssub.s32 256, 256
      %12 = vsyncadd [#allocation3], %s11
      %s14 = sshll.u32 [#allocation2], 4
      %s15 = int_to_ptr.vmem [resolvable:$true] %s14
      %17 = dma.hbm_to_vmem [thread:$0]  %s0, 256, %s15, [#allocation3]
    $region5: #{tpu_custom_call.1} parent=1 // pred_fallthru
      _
    // Predicated region
    $region6: #{tpu_custom_call.1} parent=1 // pred_check
      _
    $region7: #{tpu_custom_call.1} parent=1 // pred_check_branch
      %19 = sbr.rel (0) target = $region9
    $region8: #{tpu_custom_call.1} parent=1 // pred_region
      %20 = dma.done [#allocation3], 256
    $region9: #{tpu_custom_call.1} parent=1 // pred_fallthru
      _
    %v21 = vld [vmem:[#allocation2] sm:$0xff]
    %v22 = vld [vmem:[#allocation2 + $0x8] sm:$0xff]
    %v23 = vadd.f32 %v21, 3.0
    %v24 = vadd.f32 %v22, 3.0
    %v25 = vmax.f32 %v23, 0.0
    %v26 = vmax.f32 %v24, 0.0
    %v27 = vmin.f32 %v25, 6.0
    %v28 = vmin.f32 %v26, 6.0
    %v29 = vmul.f32 %v27, 0.16666667
    %v30 = vmul.f32 %v28, 0.16666667
    %v31 = vmul.f32 %v21, %v29
    %v32 = vmul.f32 %v22, %v30
    %33 = vst [vmem:[#allocation5] sm:$0xff] %v31
    %34 = vst [vmem:[#allocation5 + $0x8] sm:$0xff] %v32
    // Predicated region
    $region10: #{tpu_custom_call.1} parent=1 // pred_check
      _
    $region11: #{tpu_custom_call.1} parent=1 // pred_check_branch
      %36 = sbr.rel (0) target = $region13
    $region12: #{tpu_custom_call.1} parent=1 // pred_region
      %s38 = ssub.s32 256, 256
      %39 = vsyncadd [#allocation4], %s38
      %s41 = sshll.u32 [#allocation5], 4
      %s42 = int_to_ptr.vmem [resolvable:$true] %s41
      %44 = dma.vmem_to_hbm [thread:$0]  %s42, 256, %s1, [#allocation4]
    $region13: #{tpu_custom_call.1} parent=1 // pred_fallthru
      _
    // Predicated region
    $region14: #{tpu_custom_call.1} parent=1 // pred_check
      _
    $region15: #{tpu_custom_call.1} parent=1 // pred_check_branch
      %46 = sbr.rel (0) target = $region17
    $region16: #{tpu_custom_call.1} parent=1 // pred_region
      %47 = dma.done [#allocation4], 256
    $region17: #{tpu_custom_call.1} parent=1 // pred_fallthru
      _
    %48 = vsyncpa [#allocation3], 1
    %49 = vsyncpa [#allocation4], 1

</llo_original>
